<compile_context>
chip_gen: v7x
topology: tpu7x:2x2x1
jax: 0.10.0
libtpu: 0.0.40
codegen_flags: <defaults>
</compile_context>

<pallas_src>
import functools

import jax
import jax.numpy as jnp
from jax.experimental import pallas as pl
from jax.experimental.pallas import tpu as pltpu


def _round_up(n, m):
    return ((n + m - 1) // m) * m


def prepare_gated_embedding_params(w1, b1, w2, b2, gamma, beta,
                                   compute_dtype=jnp.bfloat16):
    """Pad + cast the weights ONCE (call at init time, reuse across forwards).

    w1: (D_in, D_out) pre-transposed fc weight; w2: (D_out, D_out) pre-transposed cg.fc weight.
    b1/b2/gamma/beta: (D_out,) or (1, D_out).

    The exact zero padding of the extra rows/cols is what keeps the padded Dop columns inert
    through BN, the sigmoid gate and the L2 norm -- preserve it if these arrays are cached.
    Returns (w1p, w2p, params, (d_in, d_out, tk)).
    """
    D_in, D_out = w1.shape
    Dip = _round_up(D_in, 128)
    Dop = _round_up(D_out, 128)
    # K tile for the first matmul; keep Dip an exact multiple of it so the grid divides evenly.
    tk = Dip if Dip <= 512 else 512
    Dip = _round_up(Dip, tk)

    w1p = jnp.zeros((Dip, Dop), compute_dtype).at[:D_in, :D_out].set(
        w1.astype(compute_dtype))
    w2p = jnp.zeros((Dop, Dop), compute_dtype).at[:D_out, :D_out].set(
        w2.astype(compute_dtype))

    # Stack the four per-feature parameter vectors into one (4, Dop) f32 array (one DMA tile).
    params = jnp.zeros((4, Dop), jnp.float32)
    params = params.at[0, :D_out].set(jnp.reshape(b1, (-1,)).astype(jnp.float32))
    params = params.at[1, :D_out].set(jnp.reshape(b2, (-1,)).astype(jnp.float32))
    params = params.at[2, :D_out].set(jnp.reshape(gamma, (-1,)).astype(jnp.float32))
    params = params.at[3, :D_out].set(jnp.reshape(beta, (-1,)).astype(jnp.float32))
    return w1p, w2p, params, (D_in, D_out, tk)


def gated_embedding_unit_forward(x, w1p, w2p, params, *, d_out, tk, out_dtype=None):
    """x: (B, D_in).  w1p/w2p/params: outputs of prepare_gated_embedding_params (cached)."""
    B, D_in = x.shape
    Dip, Dop = w1p.shape
    Bp = _round_up(max(B, 1), 8)
    compute_dtype = w1p.dtype
    if out_dtype is None:
        out_dtype = x.dtype

    # Only the activation is padded per call (cheap; weights were padded once at init).
    if (B, D_in) == (Bp, Dip):
        xp = x.astype(compute_dtype)
    else:
        xp = jnp.zeros((Bp, Dip), compute_dtype).at[:B, :D_in].set(
            x.astype(compute_dtype))

    num_k = Dip // tk
    inv_b = 1.0 / float(B)
    need_row_mask = (B != Bp)

    def kernel(x_ref, w1_ref, w2_ref, p_ref, o_ref, y_acc):
        k = pl.program_id(0)

        @pl.when(k == 0)
        def _init():
            y_acc[...] = jnp.zeros_like(y_acc)

        # fc matmul, K-tiled: bf16 operands ingest natively on the MXU, f32 accumulate.
        y_acc[...] += jnp.dot(x_ref[...], w1_ref[...],
                              preferred_element_type=jnp.float32)

        @pl.when(k == pl.num_programs(0) - 1)
        def _finalize():
            y = y_acc[...] + p_ref[0:1, :]                       # f32, (Bp, Dop)

            # ContextGating fc: feed the MXU a bf16 copy of y; keep the f32 y for the gate.
            g = jnp.dot(y.astype(compute_dtype), w2_ref[...],
                        preferred_element_type=jnp.float32) + p_ref[1:2, :]

            # BatchNorm1d (training-mode batch stats, biased variance, eps=1e-5):
            # one-pass sum / sum-of-squares over the real B rows only.
            if need_row_mask:
                valid = jax.lax.broadcasted_iota(jnp.int32, (Bp, 1), 0) < B
                gm = jnp.where(valid, g, 0.0)
            else:
                gm = g
            mean = jnp.sum(gm, axis=0, keepdims=True) * inv_b
            var = jnp.maximum(
                jnp.sum(gm * gm, axis=0, keepdims=True) * inv_b - mean * mean, 0.0)
            gn = (g - mean) * jax.lax.rsqrt(var + 1e-5) * p_ref[2:3, :] + p_ref[3:4, :]

            # sigmoid gate
            gated = y * jax.nn.sigmoid(gn)

            # F.normalize (L2 over dim=1, denom clamped at 1e-12) via rsqrt on the EUP:
            # rsqrt(max(ss, 1e-24)) == 1 / max(sqrt(ss), 1e-12)
            ss = jnp.sum(gated * gated, axis=1, keepdims=True)
            o_ref[...] = (gated * jax.lax.rsqrt(jnp.maximum(ss, 1e-24))
                          ).astype(o_ref.dtype)

    itemsize = jnp.dtype(compute_dtype).itemsize
    out_itemsize = jnp.dtype(out_dtype).itemsize
    blocks_bytes = (2 * (Bp * tk + tk * Dop) * itemsize   # x / w1 tiles (double-buffered)
                    + Dop * Dop * itemsize                # w2 (resident, constant index_map)
                    + 8 * Dop * 4                         # params tile (sublane-padded)
                    + 2 * Bp * Dop * out_itemsize         # output block
                    + Bp * Dop * 4)                       # f32 y accumulator scratch
    vmem_limit = min(int(blocks_bytes * 1.5) + (2 << 20), 112 * 1024 * 1024)

    cost = pl.CostEstimate(
        flops=2 * Bp * Dip * Dop + 2 * Bp * Dop * Dop + 12 * Bp * Dop,
        transcendentals=Bp * Dop + Bp + Dop,
        bytes_accessed=(Bp * Dip + Dip * Dop + Dop * Dop) * itemsize
                       + 4 * Dop * 4 + Bp * Dop * out_itemsize)

    out_p = pl.pallas_call(
        kernel,
        out_shape=jax.ShapeDtypeStruct((Bp, Dop), out_dtype),
        grid_spec=pltpu.PrefetchScalarGridSpec(
            num_scalar_prefetch=0,
            grid=(num_k,),
            in_specs=[
                pl.BlockSpec((Bp, tk), lambda k: (0, k)),     # x (activation), K-tiled
                pl.BlockSpec((tk, Dop), lambda k: (k, 0)),    # fc weight, streamed over K
                pl.BlockSpec((Dop, Dop), lambda k: (0, 0)),   # cg.fc weight, resident
                pl.BlockSpec((4, Dop), lambda k: (0, 0)),     # [b1; b2; gamma; beta]
            ],
            out_specs=pl.BlockSpec((Bp, Dop), lambda k: (0, 0)),
            scratch_shapes=[pltpu.VMEM((Bp, Dop), jnp.float32)],
        ),
        compiler_params=pltpu.CompilerParams(
            dimension_semantics=("arbitrary",),   # K is a reduction axis
            vmem_limit_bytes=vmem_limit),
        cost_estimate=cost,
    )(xp, w1p, w2p, params)

    return out_p[:B, :d_out]


if __name__ == "__main__":
    # Small shapes consistent with the module: batch=8, input_dim=32, output_dim=16
    B, D_in, D_out = 8, 32, 16

    key = jax.random.PRNGKey(0)
    kx, kw1, kb1, kw2, kb2 = jax.random.split(key, 5)

    x = jax.random.normal(kx, (B, D_in), dtype=jnp.float32)

    # nn.Linear(input_dimension, output_dimension): stored pre-transposed as (D_in, D_out)
    w1 = jax.random.normal(kw1, (D_in, D_out), dtype=jnp.float32) * 0.1
    b1 = jax.random.normal(kb1, (1, D_out), dtype=jnp.float32) * 0.1
    # ContextGating fc: nn.Linear(output_dimension, output_dimension)
    w2 = jax.random.normal(kw2, (D_out, D_out), dtype=jnp.float32) * 0.1
    b2 = jax.random.normal(kb2, (1, D_out), dtype=jnp.float32) * 0.1
    # BatchNorm1d affine params (default init: gamma=1, beta=0)
    gamma = jnp.ones((1, D_out), dtype=jnp.float32)
    beta = jnp.zeros((1, D_out), dtype=jnp.float32)

    # One-time weight preparation (padding + bf16 cast), reused across every forward call.
    w1p, w2p, params, (d_in, d_out, tk) = prepare_gated_embedding_params(
        w1, b1, w2, b2, gamma, beta)

    fwd = jax.jit(functools.partial(gated_embedding_unit_forward,
                                    d_out=d_out, tk=tk, out_dtype=jnp.float32))
    out = fwd(x, w1p, w2p, params)
    jax.block_until_ready(out)
    assert out.shape == (B, D_out)

    # Pure-f32 reference (training-mode BN, eps=1e-5; F.normalize eps=1e-12) — loose check
    # (kernel uses bf16 matmul operands).
    y_ref = x @ w1 + b1
    g_ref = y_ref @ w2 + b2
    m = jnp.mean(g_ref, axis=0, keepdims=True)
    v = jnp.mean((g_ref - m) ** 2, axis=0, keepdims=True)
    g_ref = (g_ref - m) / jnp.sqrt(v + 1e-5) * gamma + beta
    gt = y_ref * jax.nn.sigmoid(g_ref)
    ref = gt / jnp.maximum(jnp.linalg.norm(gt, axis=1, keepdims=True), 1e-12)
    err_f32 = float(jnp.max(jnp.abs(out - ref)))
    assert err_f32 < 2e-2, err_f32

    # bf16-faithful reference (mirrors the kernel's matmul operand rounding) — tight check.
    f32 = jnp.float32
    xb = x.astype(jnp.bfloat16).astype(f32)
    w1b = w1.astype(jnp.bfloat16).astype(f32)
    w2b = w2.astype(jnp.bfloat16).astype(f32)
    yb = jnp.dot(xb, w1b, precision=jax.lax.Precision.HIGHEST) + b1
    gb = jnp.dot(yb.astype(jnp.bfloat16).astype(f32), w2b,
                 precision=jax.lax.Precision.HIGHEST) + b2
    mb = jnp.mean(gb, axis=0, keepdims=True)
    vb = jnp.mean((gb - mb) ** 2, axis=0, keepdims=True)
    gb = (gb - mb) / jnp.sqrt(vb + 1e-5) * gamma + beta
    gtb = yb * jax.nn.sigmoid(gb)
    refb = gtb / jnp.maximum(jnp.linalg.norm(gtb, axis=1, keepdims=True), 1e-12)
    err_bf16 = float(jnp.max(jnp.abs(out - refb)))
    assert err_bf16 < 2e-3, err_bf16

    print("KERNEL_OK")
</pallas_src>

<mosaic_0001>
module attributes {stable_mosaic.version = 11 : i64} {
  func.func @kernel(%arg0: i32, %arg1: memref<8x128xbf16, #tpu.memory_space<vmem>>, %arg2: memref<128x128xbf16, #tpu.memory_space<vmem>>, %arg3: memref<128x128xbf16, #tpu.memory_space<vmem>>, %arg4: memref<4x128xf32, #tpu.memory_space<vmem>>, %arg5: memref<8x128xf32, #tpu.memory_space<vmem>>, %arg6: memref<8x128xf32, #tpu.memory_space<vmem>>) attributes {dimension_semantics = [#tpu.dimension_semantics<arbitrary>], iteration_bounds = array<i64: 1>, scalar_prefetch = 0 : i64, scratch_operands = 1 : i64, tpu.core_type = #tpu.core_type<tc>, window_params = [{transform_indices = @transform_0, window_bounds = array<i64: 8, 128>}, {transform_indices = @transform_1, window_bounds = array<i64: 128, 128>}, {pipeline_mode = #tpu.pipeline_mode<synchronous>, transform_indices = @transform_2, window_bounds = array<i64: 128, 128>}, {pipeline_mode = #tpu.pipeline_mode<synchronous>, transform_indices = @transform_3, window_bounds = array<i64: 4, 128>}, {pipeline_mode = #tpu.pipeline_mode<synchronous>, transform_indices = @transform_4, window_bounds = array<i64: 8, 128>}]} {
    %c0_i32 = arith.constant 0 : i32
    %0 = arith.cmpi eq, %arg0, %c0_i32 : i32
    %1 = arith.extui %0 : i1 to i32
    %c0_i32_0 = arith.constant 0 : i32
    %2 = arith.cmpi ne, %1, %c0_i32_0 : i32
    scf.if %2 {
      %cst_10 = arith.constant 0.000000e+00 : f32
      %12 = vector.broadcast %cst_10 : f32 to vector<8x128xf32>
      %c0_11 = arith.constant 0 : index
      %c0_12 = arith.constant 0 : index
      %13 = vector.load %arg6[%c0_11, %c0_12] : memref<8x128xf32, #tpu.memory_space<vmem>>, vector<8x128xf32>
      tpu.vector_store %arg6[%c0_11, %c0_12], %12 {strides = array<i32>} : memref<8x128xf32, #tpu.memory_space<vmem>>, vector<8x128xf32>,
    } else {
    }
    %c0 = arith.constant 0 : index
    %c0_1 = arith.constant 0 : index
    %3 = vector.load %arg6[%c0, %c0_1] : memref<8x128xf32, #tpu.memory_space<vmem>>, vector<8x128xf32>
    %c0_2 = arith.constant 0 : index
    %c0_3 = arith.constant 0 : index
    %4 = vector.load %arg1[%c0_2, %c0_3] : memref<8x128xbf16, #tpu.memory_space<vmem>>, vector<8x128xbf16>
    %c0_4 = arith.constant 0 : index
    %c0_5 = arith.constant 0 : index
    %5 = vector.load %arg2[%c0_4, %c0_5] : memref<128x128xbf16, #tpu.memory_space<vmem>>, vector<128x128xbf16>
    %cst = arith.constant dense<0.000000e+00> : vector<8x128xf32>
    %6 = tpu.matmul %4, %5, %cst {dimension_numbers = #tpu.dot_dimension_numbers<[1], [0], [0], [1], [0, 0, 1, 1], [], []>} : vector<8x128xbf16>, vector<128x128xbf16>, vector<8x128xf32> -> vector<8x128xf32>
    %7 = arith.addf %3, %6 : vector<8x128xf32>
    %c0_6 = arith.constant 0 : index
    %c0_7 = arith.constant 0 : index
    %8 = vector.load %arg6[%c0_6, %c0_7] : memref<8x128xf32, #tpu.memory_space<vmem>>, vector<8x128xf32>
    tpu.vector_store %arg6[%c0_6, %c0_7], %7 {strides = array<i32>} : memref<8x128xf32, #tpu.memory_space<vmem>>, vector<8x128xf32>,
    %c0_i32_8 = arith.constant 0 : i32
    %9 = arith.cmpi eq, %arg0, %c0_i32_8 : i32
    %10 = arith.extui %9 : i1 to i32
    %c0_i32_9 = arith.constant 0 : i32
    %11 = arith.cmpi ne, %10, %c0_i32_9 : i32
    scf.if %11 {
      %c0_10 = arith.constant 0 : index
      %c0_11 = arith.constant 0 : index
      %12 = vector.load %arg6[%c0_10, %c0_11] : memref<8x128xf32, #tpu.memory_space<vmem>>, vector<8x128xf32>
      %c0_12 = arith.constant 0 : index
      %c0_13 = arith.constant 0 : index
      %13 = vector.load %arg4[%c0_12, %c0_13] : memref<4x128xf32, #tpu.memory_space<vmem>>, vector<1x128xf32>
      %14 = vector.broadcast %13 : vector<1x128xf32> to vector<8x128xf32>
      %15 = arith.addf %12, %14 : vector<8x128xf32>
      %16 = arith.truncf %15 : vector<8x128xf32> to vector<8x128xbf16>
      %c0_14 = arith.constant 0 : index
      %c0_15 = arith.constant 0 : index
      %17 = vector.load %arg3[%c0_14, %c0_15] : memref<128x128xbf16, #tpu.memory_space<vmem>>, vector<128x128xbf16>
      %cst_16 = arith.constant dense<0.000000e+00> : vector<8x128xf32>
      %18 = tpu.matmul %16, %17, %cst_16 {dimension_numbers = #tpu.dot_dimension_numbers<[1], [0], [0], [1], [0, 0, 1, 1], [], []>} : vector<8x128xbf16>, vector<128x128xbf16>, vector<8x128xf32> -> vector<8x128xf32>
      %c1 = arith.constant 1 : index
      %c0_17 = arith.constant 0 : index
      %19 = vector.load %arg4[%c1, %c0_17] : memref<4x128xf32, #tpu.memory_space<vmem>>, vector<1x128xf32>
      %20 = vector.broadcast %19 : vector<1x128xf32> to vector<8x128xf32>
      %21 = arith.addf %18, %20 : vector<8x128xf32>
      %cst_18 = arith.constant dense<0.000000e+00> : vector<128xf32>
      %22 = vector.multi_reduction <add>, %21, %cst_18 [0] : vector<8x128xf32> to vector<128xf32>
      %23 = vector.shape_cast %22 : vector<128xf32> to vector<1x128xf32>
      %cst_19 = arith.constant 1.250000e-01 : f32
      %24 = vector.broadcast %cst_19 : f32 to vector<1x128xf32>
      %25 = arith.mulf %23, %24 : vector<1x128xf32>
      %26 = arith.mulf %21, %21 : vector<8x128xf32>
      %cst_20 = arith.constant dense<0.000000e+00> : vector<128xf32>
      %27 = vector.multi_reduction <add>, %26, %cst_20 [0] : vector<8x128xf32> to vector<128xf32>
      %28 = vector.shape_cast %27 : vector<128xf32> to vector<1x128xf32>
      %cst_21 = arith.constant 1.250000e-01 : f32
      %29 = vector.broadcast %cst_21 : f32 to vector<1x128xf32>
      %30 = arith.mulf %28, %29 : vector<1x128xf32>
      %31 = arith.mulf %25, %25 : vector<1x128xf32>
      %32 = arith.subf %30, %31 : vector<1x128xf32>
      %cst_22 = arith.constant 0.000000e+00 : f32
      %33 = vector.broadcast %cst_22 : f32 to vector<1x128xf32>
      %34 = arith.maximumf %32, %33 : vector<1x128xf32>
      %35 = vector.broadcast %25 : vector<1x128xf32> to vector<8x128xf32>
      %36 = arith.subf %21, %35 : vector<8x128xf32>
      %cst_23 = arith.constant 9.99999974E-6 : f32
      %37 = vector.broadcast %cst_23 : f32 to vector<1x128xf32>
      %38 = arith.addf %34, %37 : vector<1x128xf32>
      %39 = math.rsqrt %38 : vector<1x128xf32>
      %40 = vector.broadcast %39 : vector<1x128xf32> to vector<8x128xf32>
      %41 = arith.mulf %36, %40 : vector<8x128xf32>
      %c2 = arith.constant 2 : index
      %c0_24 = arith.constant 0 : index
      %42 = vector.load %arg4[%c2, %c0_24] : memref<4x128xf32, #tpu.memory_space<vmem>>, vector<1x128xf32>
      %43 = vector.broadcast %42 : vector<1x128xf32> to vector<8x128xf32>
      %44 = arith.mulf %41, %43 : vector<8x128xf32>
      %c3 = arith.constant 3 : index
      %c0_25 = arith.constant 0 : index
      %45 = vector.load %arg4[%c3, %c0_25] : memref<4x128xf32, #tpu.memory_space<vmem>>, vector<1x128xf32>
      %46 = vector.broadcast %45 : vector<1x128xf32> to vector<8x128xf32>
      %47 = arith.addf %44, %46 : vector<8x128xf32>
      %48 = arith.negf %47 : vector<8x128xf32>
      %49 = math.exp %48 : vector<8x128xf32>
      %cst_26 = arith.constant 1.000000e+00 : f32
      %50 = vector.broadcast %cst_26 : f32 to vector<8x128xf32>
      %51 = arith.addf %50, %49 : vector<8x128xf32>
      %52 = arith.divf %50, %51 : vector<8x128xf32>
      %53 = arith.mulf %15, %52 : vector<8x128xf32>
      %54 = arith.mulf %53, %53 : vector<8x128xf32>
      %cst_27 = arith.constant dense<0.000000e+00> : vector<8xf32>
      %55 = vector.multi_reduction <add>, %54, %cst_27 [1] : vector<8x128xf32> to vector<8xf32>
      %56 = vector.shape_cast %55 : vector<8xf32> to vector<8x1xf32>
      %cst_28 = arith.constant 1.000000e-24 : f32
      %57 = vector.broadcast %cst_28 : f32 to vector<8x1xf32>
      %58 = arith.maximumf %56, %57 : vector<8x1xf32>
      %59 = math.rsqrt %58 : vector<8x1xf32>
      %60 = vector.broadcast %59 : vector<8x1xf32> to vector<8x128xf32>
      %61 = arith.mulf %53, %60 : vector<8x128xf32>
      %c0_29 = arith.constant 0 : index
      %c0_30 = arith.constant 0 : index
      %62 = vector.load %arg5[%c0_29, %c0_30] : memref<8x128xf32, #tpu.memory_space<vmem>>, vector<8x128xf32>
      tpu.vector_store %arg5[%c0_29, %c0_30], %61 {strides = array<i32>} : memref<8x128xf32, #tpu.memory_space<vmem>>, vector<8x128xf32>,
    } else {
    }
    return
  }
  func.func @transform_0(%arg0: i32) -> (i32, i32) {
    %c0_i32 = arith.constant 0 : i32
    %c0_i32_0 = arith.constant 0 : i32
    return %c0_i32, %arg0 : i32, i32
  }
  func.func @transform_1(%arg0: i32) -> (i32, i32) {
    %c0_i32 = arith.constant 0 : i32
    %c0_i32_0 = arith.constant 0 : i32
    return %arg0, %c0_i32 : i32, i32
  }
  func.func @transform_2(%arg0: i32) -> (i32, i32) {
    %c0_i32 = arith.constant 0 : i32
    %c0_i32_0 = arith.constant 0 : i32
    %c0_i32_1 = arith.constant 0 : i32
    return %c0_i32, %c0_i32_0 : i32, i32
  }
  func.func @transform_3(%arg0: i32) -> (i32, i32) {
    %c0_i32 = arith.constant 0 : i32
    %c0_i32_0 = arith.constant 0 : i32
    %c0_i32_1 = arith.constant 0 : i32
    return %c0_i32, %c0_i32_0 : i32, i32
  }
  func.func @transform_4(%arg0: i32) -> (i32, i32) {
    %c0_i32 = arith.constant 0 : i32
    %c0_i32_0 = arith.constant 0 : i32
    %c0_i32_1 = arith.constant 0 : i32
    return %c0_i32, %c0_i32_0 : i32, i32
  }
}

</mosaic_0001>

<llo_original>
// kernel: gated_embedding_unit_forward.1
$region0: #{gated_embedding_unit_forward.1}
  #allocation0 [shape = 'u32[]', space=smem, size = 0x4, offset = 0x4, fixed_abs, tag = 'smem constant byte address 0x4 - core index']
  #allocation1 [shape = 'u32[144,128]{1,0:T(1,128)}', space=vmem, size = 0x12000, scoped, tag = 'internal scratch']
  #allocation2 [shape = 'f32[8,128]{1,0:T(8,128)}', space=vmem, size = 0x1000, scoped, tag = 'scratch operand']
  %s0 = inlined_call_operand.vmem [shape: bf16[8,128], index: 0, kind: input, shape index: {}]
  %s1 = inlined_call_operand.hbm [shape: bf16[128,128], index: 1, kind: input, shape index: {}]
  %s2 = inlined_call_operand.hbm [shape: bf16[128,128], index: 2, kind: input, shape index: {}]
  %s3 = inlined_call_operand.vmem [shape: f32[4,128], index: 3, kind: input, shape index: {}]
  %s4 = inlined_call_operand.hbm [shape: f32[8,128], index: 4, kind: output, shape index: {}]
  %s5 = sld [smem:[#allocation0]]
  $region42: #{gated_embedding_unit_forward.1} parent=0
    _
  %s7 = ssub.s32 1, %s5
  %s8 = scalar_select 0, %s7, %s5
  $region1: #{gated_embedding_unit_forward.1} parent=0
    #allocation3 [shape = 'u8[32768]{0}', space=vmem, size = 0x8000, scoped, tag = 'input window, operand 1, single buffered']
    #allocation4 [shape = 's32[1]{0}', space=sflag, size = 0x4, scoped, tag = 'scoped memory for gated_embedding_unit_forward.1']
    #allocation5 [shape = 's32[1]{0}', space=sflag, size = 0x4, scoped, tag = 'scoped memory for gated_embedding_unit_forward.1']
    #allocation6 [shape = 'u8[32768]{0}', space=vmem, size = 0x8000, scoped, tag = 'input window, operand 2, single buffered']
    #allocation7 [shape = 's32[1]{0}', space=sflag, size = 0x4, scoped, tag = 'scoped memory for gated_embedding_unit_forward.1']
    #allocation8 [shape = 'u8[4096]{0}', space=vmem, size = 0x1000, scoped, tag = 'output window, operand 0, single buffered']
    %9 = vsyncpa [#allocation4], 0
    %10 = vsyncpa [#allocation7], 0
    %11 = vsyncpa [#allocation5], 0
    // Predicated region
    $region2: #{gated_embedding_unit_forward.1} parent=1 // pred_check
      _
    $region3: #{gated_embedding_unit_forward.1} parent=1 // pred_check_branch
      %13 = sbr.rel (0) target = $region5
    $region4: #{gated_embedding_unit_forward.1} parent=1 // pred_region
      _
    $region5: #{gated_embedding_unit_forward.1} parent=1 // pred_fallthru
      _
    // Predicated region
    $region6: #{gated_embedding_unit_forward.1} parent=1 // pred_check
      _
    $region7: #{gated_embedding_unit_forward.1} parent=1 // pred_check_branch
      %15 = sbr.rel (0) target = $region9
    $region8: #{gated_embedding_unit_forward.1} parent=1 // pred_region
      %s17 = ssub.s32 1024, 1024
      %18 = vsyncadd [#allocation4], %s17
      %s19 = sshll.u32 [#allocation3], 4
      %s20 = int_to_ptr.vmem [resolvable:$true] %s19
      %25 = dma.hbm_to_vmem [thread:$0]  %s1, 1024, %s20, [#allocation4], 64, 64, 4
    $region9: #{gated_embedding_unit_forward.1} parent=1 // pred_fallthru
      _
    // Predicated region
    $region10: #{gated_embedding_unit_forward.1} parent=1 // pred_check
      _
    $region11: #{gated_embedding_unit_forward.1} parent=1 // pred_check_branch
      %27 = sbr.rel (0) target = $region13
    $region12: #{gated_embedding_unit_forward.1} parent=1 // pred_region
      %s29 = ssub.s32 1024, 1024
      %30 = vsyncadd [#allocation7], %s29
      %s31 = sshll.u32 [#allocation6], 4
      %s32 = int_to_ptr.vmem [resolvable:$true] %s31
      %37 = dma.hbm_to_vmem [thread:$0]  %s2, 1024, %s32, [#allocation7], 64, 64, 4
    $region13: #{gated_embedding_unit_forward.1} parent=1 // pred_fallthru
      _
    // Predicated region
    $region14: #{gated_embedding_unit_forward.1} parent=1 // pred_check
      _
    $region15: #{gated_embedding_unit_forward.1} parent=1 // pred_check_branch
      %39 = sbr.rel (0) target = $region17
    $region16: #{gated_embedding_unit_forward.1} parent=1 // pred_region
      _
    $region17: #{gated_embedding_unit_forward.1} parent=1 // pred_fallthru
      _
    // Predicated region
    $region18: #{gated_embedding_unit_forward.1} parent=1 // pred_check
      _
    $region19: #{gated_embedding_unit_forward.1} parent=1 // pred_check_branch
      %41 = sbr.rel (0) target = $region21
    $region20: #{gated_embedding_unit_forward.1} parent=1 // pred_region
      %42 = dma.done [#allocation4], 1024
    $region21: #{gated_embedding_unit_forward.1} parent=1 // pred_fallthru
      _
    // Predicated region
    $region22: #{gated_embedding_unit_forward.1} parent=1 // pred_check
      _
    $region23: #{gated_embedding_unit_forward.1} parent=1 // pred_check_branch
      %44 = sbr.rel (0) target = $region25
    $region24: #{gated_embedding_unit_forward.1} parent=1 // pred_region
      %45 = dma.done [#allocation7], 1024
    $region25: #{gated_embedding_unit_forward.1} parent=1 // pred_fallthru
      _
    %p47 = scmp.eq.s32.totalorder 0, 0
    // Predicated region
    $region26: #{gated_embedding_unit_forward.1} parent=1 // pred_check
      %p48 = pneg %p47
    $region27: #{gated_embedding_unit_forward.1} parent=1 // pred_check_branch
      %50 = sbr.rel (%p48) target = $region29
    $region28: #{gated_embedding_unit_forward.1} parent=1 // pred_region
      %51 = vst [vmem:[#allocation2] sm:$0xff] 0.0
    $region29: #{gated_embedding_unit_forward.1} parent=1 // pred_fallthru
      _
    %v52 = vld [vmem:[#allocation2] sm:$0xff]
    %v53 = vld [vmem:[%s0] sm:$0xf]
    %v54 = vld [vmem:[#allocation3] sm:$0xf]
    %v55 = vld [vmem:[#allocation3 + $0x4] sm:$0xf]
    %v56 = vld [vmem:[#allocation3 + $0x8] sm:$0xf]
    %v57 = vld [vmem:[#allocation3 + $0xc] sm:$0xf]
    %v58 = vld [vmem:[#allocation3 + $0x10] sm:$0xf]
    %v59 = vld [vmem:[#allocation3 + $0x14] sm:$0xf]
    %v60 = vld [vmem:[#allocation3 + $0x18] sm:$0xf]
    %v61 = vld [vmem:[#allocation3 + $0x1c] sm:$0xf]
    %v62 = vld [vmem:[#allocation3 + $0x20] sm:$0xf]
    %v63 = vld [vmem:[#allocation3 + $0x24] sm:$0xf]
    %v64 = vld [vmem:[#allocation3 + $0x28] sm:$0xf]
    %v65 = vld [vmem:[#allocation3 + $0x2c] sm:$0xf]
    %v66 = vld [vmem:[#allocation3 + $0x30] sm:$0xf]
    %v67 = vld [vmem:[#allocation3 + $0x34] sm:$0xf]
    %v68 = vld [vmem:[#allocation3 + $0x38] sm:$0xf]
    %v69 = vld [vmem:[#allocation3 + $0x3c] sm:$0xf]
    %v86 = vunpack.c.l.b16 %v54
    %v87 = vunpack.c.l.b16 %v55
    %v88 = vunpack.c.l.b16 %v56
    %v89 = vunpack.c.l.b16 %v57
    %v90 = vunpack.c.l.b16 %v58
    %v91 = vunpack.c.l.b16 %v59
    %v92 = vunpack.c.l.b16 %v60
    %v93 = vunpack.c.l.b16 %v61
    %v94 = vunpack.c.l.b16 %v62
    %v95 = vunpack.c.l.b16 %v63
    %v96 = vunpack.c.l.b16 %v64
    %v97 = vunpack.c.l.b16 %v65
    %v98 = vunpack.c.l.b16 %v66
    %v99 = vunpack.c.l.b16 %v67
    %v100 = vunpack.c.l.b16 %v68
    %v101 = vunpack.c.l.b16 %v69
    %v102 = vpack.c.b16 %v87, %v86
    %v103 = vpack.c.b16 %v89, %v88
    %v104 = vpack.c.b16 %v91, %v90
    %v105 = vpack.c.b16 %v93, %v92
    %v106 = vpack.c.b16 %v95, %v94
    %v107 = vpack.c.b16 %v97, %v96
    %v108 = vpack.c.b16 %v99, %v98
    %v109 = vpack.c.b16 %v101, %v100
    %118 = vmatprep.subr.bf16.mxu0 0
    %119 = vmatpush1.bf16.msra.mxu0 %v102
    %120 = vmatprep.subr.bf16.mxu0 0
    %121 = vmatpush1.bf16.msra.mxu0 %v103
    %122 = vmatprep.subr.bf16.mxu0 0
    %123 = vmatpush1.bf16.msra.mxu0 %v104
    %124 = vmatprep.subr.bf16.mxu0 0
    %125 = vmatpush1.bf16.msra.mxu0 %v105
    %126 = vmatprep.subr.bf16.mxu0 0
    %127 = vmatpush1.bf16.msra.mxu0 %v106
    %128 = vmatprep.subr.bf16.mxu0 0
    %129 = vmatpush1.bf16.msra.mxu0 %v107
    %130 = vmatprep.subr.bf16.mxu0 0
    %131 = vmatpush1.bf16.msra.mxu0 %v108
    %132 = vmatprep.subr.bf16.mxu0 0
    %133 = vmatpush1.bf16.msra.mxu0 %v109
    %134 = vmatprep.subr.bf16.mxu0 0
    %135 = vmatpush1.bf16.msra.mxu0 0
    %136 = vmatprep.subr.bf16.mxu0 0
    %137 = vmatpush1.bf16.msra.mxu0 0
    %138 = vmatprep.subr.bf16.mxu0 0
    %139 = vmatpush1.bf16.msra.mxu0 0
    %140 = vmatprep.subr.bf16.mxu0 0
    %141 = vmatpush1.bf16.msra.mxu0 0
    %142 = vmatprep.subr.bf16.mxu0 0
    %143 = vmatpush1.bf16.msra.mxu0 0
    %144 = vmatprep.subr.bf16.mxu0 0
    %145 = vmatpush1.bf16.msra.mxu0 0
    %146 = vmatprep.subr.bf16.mxu0 0
    %147 = vmatpush1.bf16.msra.mxu0 0
    %148 = vmatprep.subr.bf16.mxu0 0
    %149 = vmatpush1.bf16.msra.mxu0 0
    %150 = vmatprep.mubr.bf16.mxu0 0
    %151 = vmatmul.mubr.bf16.gmra.mrb[0].mxu0 %v53
    %v152 = vpop.f32.mrb[0].mxu0
    %v153 = vadd.f32 0.0, %v152
    %v154 = vpop.f32.mrb[0].mxu0
    %v155 = vpop.f32.mrb[0].mxu0
    %v156 = vpop.f32.mrb[0].mxu0
    %157 = vdwg.mxu0
    %v158 = vadd.f32 %v52, %v153
    %159 = vst [vmem:[#allocation2] sm:$0xff] %v158
    // Predicated region
    $region30: #{gated_embedding_unit_forward.1} parent=1 // pred_check
      %p160 = pneg %p47
    $region31: #{gated_embedding_unit_forward.1} parent=1 // pred_check_branch
      %162 = sbr.rel (%p160) target = $region33
    $region32: #{gated_embedding_unit_forward.1} parent=1 // pred_region
      %v163 = vld [vmem:[#allocation2] sm:$0xff]
      %v164 = vld [vmem:[%s3] sm:$0x1]
      %v165 = vlaneseq
      %v166 = vshrl.u32 %v165, 7
      %v167 = vsub.s32 0, %v166
      %v168 = vrot.slane %v164, %v167
      %v169 = vadd.f32 %v163, %v168
      %v170 = vpack.c.bf16 %v169, %v169
      %v171 = vld [vmem:[#allocation6] sm:$0xf]
      %v172 = vld [vmem:[#allocation6 + $0x4] sm:$0xf]
      %v173 = vld [vmem:[#allocation6 + $0x8] sm:$0xf]
      %v174 = vld [vmem:[#allocation6 + $0xc] sm:$0xf]
      %v175 = vld [vmem:[#allocation6 + $0x10] sm:$0xf]
      %v176 = vld [vmem:[#allocation6 + $0x14] sm:$0xf]
      %v177 = vld [vmem:[#allocation6 + $0x18] sm:$0xf]
      %v178 = vld [vmem:[#allocation6 + $0x1c] sm:$0xf]
      %v179 = vld [vmem:[#allocation6 + $0x20] sm:$0xf]
      %v180 = vld [vmem:[#allocation6 + $0x24] sm:$0xf]
      %v181 = vld [vmem:[#allocation6 + $0x28] sm:$0xf]
      %v182 = vld [vmem:[#allocation6 + $0x2c] sm:$0xf]
      %v183 = vld [vmem:[#allocation6 + $0x30] sm:$0xf]
      %v184 = vld [vmem:[#allocation6 + $0x34] sm:$0xf]
      %v185 = vld [vmem:[#allocation6 + $0x38] sm:$0xf]
      %v186 = vld [vmem:[#allocation6 + $0x3c] sm:$0xf]
      %v187 = vld [vmem:[%s3 + $0x1] sm:$0x1]
      %v188 = vlaneseq
      %v189 = vshrl.u32 %v188, 7
      %v190 = vsub.s32 0, %v189
      %v191 = vrot.slane %v187, %v190
      %v208 = vunpack.c.l.b16 %v171
      %v209 = vunpack.c.l.b16 %v172
      %v210 = vunpack.c.l.b16 %v173
      %v211 = vunpack.c.l.b16 %v174
      %v212 = vunpack.c.l.b16 %v175
      %v213 = vunpack.c.l.b16 %v176
      %v214 = vunpack.c.l.b16 %v177
      %v215 = vunpack.c.l.b16 %v178
      %v216 = vunpack.c.l.b16 %v179
      %v217 = vunpack.c.l.b16 %v180
      %v218 = vunpack.c.l.b16 %v181
      %v219 = vunpack.c.l.b16 %v182
      %v220 = vunpack.c.l.b16 %v183
      %v221 = vunpack.c.l.b16 %v184
      %v222 = vunpack.c.l.b16 %v185
      %v223 = vunpack.c.l.b16 %v186
      %v224 = vpack.c.b16 %v209, %v208
      %v225 = vpack.c.b16 %v211, %v210
      %v226 = vpack.c.b16 %v213, %v212
      %v227 = vpack.c.b16 %v215, %v214
      %v228 = vpack.c.b16 %v217, %v216
      %v229 = vpack.c.b16 %v219, %v218
      %v230 = vpack.c.b16 %v221, %v220
      %v231 = vpack.c.b16 %v223, %v222
      %240 = vmatprep.subr.bf16.mxu0 0
      %241 = vmatpush1.bf16.msra.mxu0 %v224
      %242 = vmatprep.subr.bf16.mxu0 0
      %243 = vmatpush1.bf16.msra.mxu0 %v225
      %244 = vmatprep.subr.bf16.mxu0 0
      %245 = vmatpush1.bf16.msra.mxu0 %v226
      %246 = vmatprep.subr.bf16.mxu0 0
      %247 = vmatpush1.bf16.msra.mxu0 %v227
      %248 = vmatprep.subr.bf16.mxu0 0
      %249 = vmatpush1.bf16.msra.mxu0 %v228
      %250 = vmatprep.subr.bf16.mxu0 0
      %251 = vmatpush1.bf16.msra.mxu0 %v229
      %252 = vmatprep.subr.bf16.mxu0 0
      %253 = vmatpush1.bf16.msra.mxu0 %v230
      %254 = vmatprep.subr.bf16.mxu0 0
      %255 = vmatpush1.bf16.msra.mxu0 %v231
      %256 = vmatprep.subr.bf16.mxu0 0
      %257 = vmatpush1.bf16.msra.mxu0 0
      %258 = vmatprep.subr.bf16.mxu0 0
      %259 = vmatpush1.bf16.msra.mxu0 0
      %260 = vmatprep.subr.bf16.mxu0 0
      %261 = vmatpush1.bf16.msra.mxu0 0
      %262 = vmatprep.subr.bf16.mxu0 0
      %263 = vmatpush1.bf16.msra.mxu0 0
      %264 = vmatprep.subr.bf16.mxu0 0
      %265 = vmatpush1.bf16.msra.mxu0 0
      %266 = vmatprep.subr.bf16.mxu0 0
      %267 = vmatpush1.bf16.msra.mxu0 0
      %268 = vmatprep.subr.bf16.mxu0 0
      %269 = vmatpush1.bf16.msra.mxu0 0
      %270 = vmatprep.subr.bf16.mxu0 0
      %271 = vmatpush1.bf16.msra.mxu0 0
      %272 = vmatprep.mubr.bf16.mxu0 0
      %273 = vmatmul.mubr.bf16.gmra.mrb[0].mxu0 %v170
      %v274 = vpop.f32.mrb[0].mxu0
      %v275 = vadd.f32 %v191, %v274
      %v276 = vpop.f32.mrb[0].mxu0
      %v277 = vpop.f32.mrb[0].mxu0
      %v278 = vpop.f32.mrb[0].mxu0
      %279 = vdwg.mxu0
      %v280 = vrot.slane %v275, 4
      %v281 = vadd.f32 %v275, %v280
      %v282 = vrot.slane %v281, 2
      %v283 = vadd.f32 %v281, %v282
      %v284 = vrot.slane %v283, 1
      %v285 = vadd.f32 %v283, %v284
      %v286 = vmul.f32 %v285, 0.125
      %v287 = vmul.f32 %v275, %v275
      %v288 = vrot.slane %v287, 4
      %v289 = vadd.f32 %v287, %v288
      %v290 = vrot.slane %v289, 2
      %v291 = vadd.f32 %v289, %v290
      %v292 = vrot.slane %v291, 1
      %v293 = vadd.f32 %v291, %v292
      %v294 = vmul.f32 %v293, 0.125
      %v295 = vmul.f32 %v286, %v286
      %v296 = vsub.f32 %v294, %v295
      %v297 = vmax.f32 %v296, 0.0
      %v298 = vsub.f32 %v275, %v286
      %v299 = vadd.f32 %v297, 1e-05
      %v300 = vrsqrt.pop %v299
      %v301 = vmul.f32 %v298, %v300
      %v302 = vld [vmem:[%s3 + $0x2] sm:$0x1]
      %v303 = vlaneseq
      %v304 = vshrl.u32 %v303, 7
      %v305 = vsub.s32 0, %v304
      %v306 = vrot.slane %v302, %v305
      %v307 = vmul.f32 %v301, %v306
      %v308 = vld [vmem:[%s3 + $0x3] sm:$0x1]
      %v309 = vlaneseq
      %v310 = vshrl.u32 %v309, 7
      %v311 = vsub.s32 0, %v310
      %v312 = vrot.slane %v308, %v311
      %v313 = vadd.f32 %v307, %v312
      %v314 = vxor.u32 %v313, 2147483648
      %v315 = vmul.f32 %v314, 1.442695
      %v316 = vpow.pop %v315
      %v317 = vadd.f32 %v316, 1.0
      %v318 = vrcp.pop %v317
      %v319 = vmul.f32 1.0, %v318
      %v320 = vmul.f32 %v169, %v319
      %v321 = vmul.f32 %v320, %v320
      %322 = vadd.xlane.f32.xlu0 %v321
      %v323 = vpop.xlane.xlu0 %322
      %v324 = vmax.f32 %v323, 1e-24
      %v325 = vrsqrt.pop %v324
      %v326 = vmul.f32 %v320, %v325
      %327 = vst [vmem:[#allocation8] sm:$0xff] %v326
    $region33: #{gated_embedding_unit_forward.1} parent=1 // pred_fallthru
      _
    // Predicated region
    $region34: #{gated_embedding_unit_forward.1} parent=1 // pred_check
      _
    $region35: #{gated_embedding_unit_forward.1} parent=1 // pred_check_branch
      %329 = sbr.rel (0) target = $region37
    $region36: #{gated_embedding_unit_forward.1} parent=1 // pred_region
      %s331 = ssub.s32 128, 128
      %332 = vsyncadd [#allocation5], %s331
      %s334 = sshll.u32 [#allocation8], 4
      %s335 = int_to_ptr.vmem [resolvable:$true] %s334
      %337 = dma.vmem_to_hbm [thread:$0]  %s335, 128, %s4, [#allocation5]
    $region37: #{gated_embedding_unit_forward.1} parent=1 // pred_fallthru
      _
    // Predicated region
    $region38: #{gated_embedding_unit_forward.1} parent=1 // pred_check
      _
    $region39: #{gated_embedding_unit_forward.1} parent=1 // pred_check_branch
      %339 = sbr.rel (0) target = $region41
    $region40: #{gated_embedding_unit_forward.1} parent=1 // pred_region
      %340 = dma.done [#allocation5], 128
    $region41: #{gated_embedding_unit_forward.1} parent=1 // pred_fallthru
      _
    %341 = vsyncpa [#allocation4], 1
    %342 = vsyncpa [#allocation7], 1
    %343 = vsyncpa [#allocation5], 1

</llo_original>
